<compile_context>
chip_gen: v7x
topology: tpu7x:2x2x1
jax: 0.10.0
libtpu: 0.0.40
codegen_flags: <defaults>
</compile_context>

<pallas_src>
import math

import jax
import jax.numpy as jnp
import numpy as np
from jax.experimental import pallas as pl
from jax.experimental.pallas import tpu as pltpu


def _compare_dtype():
    """bf16 expand/compare on chips with a bf16 VPU (v6e/v7x); f32 elsewhere."""
    try:
        kind = jax.devices()[0].device_kind.lower()
    except Exception:
        return jnp.float32
    if ("v6" in kind) or ("v7" in kind) or ("7x" in kind):
        return jnp.bfloat16
    return jnp.float32


def _make_folded_kernel(C: int, G: int, tg: int, cmp_dtype):
    """G > 1: G input rows folded per output row of width W = G*C (lane-dense)."""
    W = G * C
    TR = min(tg, 256)        # row sub-chunk: bounds per-step temporaries
    n_chunks = tg // TR      # tg is a multiple of TR by construction

    def kernel(x_ref, sel_ref, cls_ref, o_ref):
        sel = sel_ref[...]   # (G, W) bf16 one-hot selection matrix (loop invariant)
        cls = cls_ref[...]   # (1, W) cmp_dtype: class id (j % C) of output column j

        def chunk(r):
            x = x_ref[pl.ds(r, TR), :]                                 # (TR, G) int32
            x_bf = x.astype(jnp.float32).astype(jnp.bfloat16)
            # x_exp[i, j] = x[i, j // C] via MXU matmul with the 0/1 selection
            # matrix; values < 256 and one-hot columns -> exact in bf16/f32.
            x_exp = jnp.dot(x_bf, sel, preferred_element_type=cmp_dtype)  # (TR, W)
            o_ref[pl.ds(r, TR), :] = (x_exp == cls).astype(o_ref.dtype)

        if n_chunks == 1:
            chunk(0)
        else:
            def body(i, carry):
                chunk(pl.multiple_of(i * TR, TR))
                return carry
            jax.lax.fori_loop(0, n_chunks, body, 0)

    return kernel


def _make_plain_kernel(C: int, tg: int):
    """G == 1: output row == input row; class axis is the full last dim."""
    TR = min(tg, 256)
    n_chunks = tg // TR

    def kernel(x_ref, o_ref):
        col = jax.lax.broadcasted_iota(jnp.int32, (1, C), 1)   # 0..C-1 (lanes)

        def chunk(r):
            x = x_ref[pl.ds(r, TR), :]                         # (TR, 1) int32
            o_ref[pl.ds(r, TR), :] = (x == col).astype(o_ref.dtype)

        if n_chunks == 1:
            chunk(0)
        else:
            def body(i, carry):
                chunk(pl.multiple_of(i * TR, TR))
                return carry
            jax.lax.fori_loop(0, n_chunks, body, 0)

    return kernel


def one_hot(x: jax.Array, cardinality: int, *,
            dtype=jnp.int8, target_step_bytes: int = 8 << 20) -> jax.Array:
    """Pallas equivalent of torch.nn.functional.one_hot(x, cardinality).

    Returns x.shape + (cardinality,) as int8 (0/1 values).
    """
    C = int(cardinality)
    assert C >= 1
    orig_shape = x.shape
    xf = x.reshape(-1).astype(jnp.int32)
    N = int(xf.shape[0])

    # Fold G consecutive rows into one output row of width W = G*C so every
    # store is a full-lane (multiple-of-128) slab.  C <= 256 keeps the bf16
    # matmul / compares exact (coupled: do not relax one without the other).
    G = 1
    if C % 128 != 0 and C <= 256:
        G = 128 // math.gcd(C, 128)
    W = G * C

    # Pad only to a multiple of G (needed for the (NG, G) reshape).  The grid
    # uses cdiv, so the last partial row-tile is masked by Pallas rather than
    # padded to a tile multiple and sliced off afterwards.
    NG = -(-N // G)
    N_pad = NG * G
    if N_pad != N:
        xf = jnp.pad(xf, (0, N_pad - N))
    x2 = xf.reshape(NG, G)

    # Row-tile size: ~target_step_bytes of output+input HBM traffic per grid
    # step, capped so the grid keeps >= ~4 steps (pipelining / v7x megacore),
    # aligned so the in-kernel 256-row compute chunks divide it evenly.
    per_row_bytes = W + 4 * G
    tg = max(1, target_step_bytes // per_row_bytes)
    tg = min(tg, max(1, -(-NG // 4)))
    if tg >= 256:
        tg = (tg // 256) * 256
    elif tg >= 32:
        tg = -(-tg // 32) * 32
    else:
        tg = -(-tg // 8) * 8
    grid = (pl.cdiv(NG, tg),)

    cmp_dtype = _compare_dtype()
    compiler_params = pltpu.CompilerParams(
        dimension_semantics=("parallel",),   # lets v7x's 2 TCs split the row axis
        vmem_limit_bytes=32 * 1024 * 1024,   # fits v5e/v6e/v7x; ~2x output tile used
    )
    out_shape = jax.ShapeDtypeStruct((NG, W), dtype)
    x_spec = pl.BlockSpec((tg, G), lambda i: (i, 0))
    out_spec = pl.BlockSpec((tg, W), lambda i: (i, 0))

    if G == 1:
        out2 = pl.pallas_call(
            _make_plain_kernel(C, tg),
            out_shape=out_shape,
            grid=grid,
            in_specs=[x_spec],
            out_specs=out_spec,
            compiler_params=compiler_params,
        )(x2)
    else:
        # Loop-invariant constants hoisted out of the kernel: 0/1 selection
        # matrix (flattened output column j -> source row j // C) and per-column
        # class ids (j % C).  Their block index never changes -> DMA'd once.
        col = np.arange(W)
        sel_np = (np.arange(G)[:, None] == (col // C)[None, :]).astype(np.float32)
        sel_bf = jnp.asarray(sel_np, dtype=jnp.bfloat16)                    # (G, W)
        cls = jnp.asarray((col % C).astype(np.float32)[None, :], dtype=cmp_dtype)  # (1, W)

        out2 = pl.pallas_call(
            _make_folded_kernel(C, G, tg, cmp_dtype),
            out_shape=out_shape,
            grid=grid,
            in_specs=[x_spec,
                      pl.BlockSpec((G, W), lambda i: (0, 0)),
                      pl.BlockSpec((1, W), lambda i: (0, 0))],
            out_specs=out_spec,
            compiler_params=compiler_params,
        )(x2, sel_bf, cls)

    out = out2.reshape(N_pad, C)   # contiguous un-fold (no copy)
    if N_pad != N:
        out = out[:N]              # only when N % G != 0
    return out.reshape(*orig_shape, C)


if __name__ == "__main__":
    key = jax.random.PRNGKey(0)
    k0, k1, k2 = jax.random.split(key, 3)

    # Small shapes consistent with the module: (batch=2, seq=8), cardinality=16.
    B, S, CARDINALITY = 2, 8, 16
    x = jax.random.randint(k0, (B, S), 0, CARDINALITY, dtype=jnp.int32)
    out = jax.block_until_ready(one_hot(x, CARDINALITY))
    ref = jax.nn.one_hot(x, CARDINALITY, dtype=jnp.int8)
    assert out.shape == (B, S, CARDINALITY)
    assert out.dtype == jnp.int8
    assert bool(jnp.all(out == ref))

    # Un-folded path (C a multiple of 128) with a multi-step grid.
    C2 = 128
    x2 = jax.random.randint(k1, (B, S), 0, C2, dtype=jnp.int32)
    out2 = jax.block_until_ready(one_hot(x2, C2))
    assert bool(jnp.all(out2 == jax.nn.one_hot(x2, C2, dtype=jnp.int8)))

    # N not a multiple of the fold factor G (exercises pad + trailing slice).
    C3 = 16
    x3 = jax.random.randint(k2, (3, 5), 0, C3, dtype=jnp.int32)
    out3 = jax.block_until_ready(one_hot(x3, C3))
    assert out3.shape == (3, 5, C3)
    assert bool(jnp.all(out3 == jax.nn.one_hot(x3, C3, dtype=jnp.int8)))

    print("KERNEL_OK")
</pallas_src>

<mosaic_0001>
module attributes {stable_mosaic.version = 11 : i64} {
  func.func @kernel(%arg0: i32, %arg1: memref<8x8xi32, #tpu.memory_space<vmem>>, %arg2: memref<8x128xbf16, #tpu.memory_space<vmem>>, %arg3: memref<1x128xf32, #tpu.memory_space<vmem>>, %arg4: memref<8x128xi8, #tpu.memory_space<vmem>>) attributes {dimension_semantics = [#tpu.dimension_semantics<parallel>], iteration_bounds = array<i64: 1>, scalar_prefetch = 0 : i64, scratch_operands = 0 : i64, tpu.core_type = #tpu.core_type<tc>, window_params = [{transform_indices = @transform_0, window_bounds = array<i64: 8, 8>}, {pipeline_mode = #tpu.pipeline_mode<synchronous>, transform_indices = @transform_1, window_bounds = array<i64: 8, 128>}, {pipeline_mode = #tpu.pipeline_mode<synchronous>, transform_indices = @transform_2, window_bounds = array<i64: 1, 128>}, {transform_indices = @transform_3, window_bounds = array<i64: 8, 128>}]} {
    %c0 = arith.constant 0 : index
    %c0_0 = arith.constant 0 : index
    %0 = vector.load %arg2[%c0, %c0_0] : memref<8x128xbf16, #tpu.memory_space<vmem>>, vector<8x128xbf16>
    %c0_1 = arith.constant 0 : index
    %c0_2 = arith.constant 0 : index
    %1 = vector.load %arg3[%c0_1, %c0_2] : memref<1x128xf32, #tpu.memory_space<vmem>>, vector<1x128xf32>
    %c0_3 = arith.constant 0 : index
    %c0_4 = arith.constant 0 : index
    %2 = vector.load %arg1[%c0_3, %c0_4] : memref<8x8xi32, #tpu.memory_space<vmem>>, vector<8x8xi32>
    %3 = arith.sitofp %2 : vector<8x8xi32> to vector<8x8xf32>
    %4 = arith.truncf %3 : vector<8x8xf32> to vector<8x8xbf16>
    %cst = arith.constant dense<0.000000e+00> : vector<8x128xf32>
    %5 = tpu.matmul %4, %0, %cst {dimension_numbers = #tpu.dot_dimension_numbers<[1], [0], [0], [1], [0, 0, 1, 1], [], []>} : vector<8x8xbf16>, vector<8x128xbf16>, vector<8x128xf32> -> vector<8x128xf32>
    %6 = vector.broadcast %1 : vector<1x128xf32> to vector<8x128xf32>
    %7 = arith.cmpf oeq, %5, %6 : vector<8x128xf32>
    %8 = arith.extui %7 : vector<8x128xi1> to vector<8x128xi8>
    %c0_5 = arith.constant 0 : index
    %c0_6 = arith.constant 0 : index
    %9 = vector.load %arg4[%c0_5, %c0_6] : memref<8x128xi8, #tpu.memory_space<vmem>>, vector<8x128xi8>
    tpu.vector_store %arg4[%c0_5, %c0_6], %8 {strides = array<i32>} : memref<8x128xi8, #tpu.memory_space<vmem>>, vector<8x128xi8>,
    return
  }
  func.func @transform_0(%arg0: i32) -> (i32, i32) {
    %c0_i32 = arith.constant 0 : i32
    %c0_i32_0 = arith.constant 0 : i32
    return %arg0, %c0_i32 : i32, i32
  }
  func.func @transform_1(%arg0: i32) -> (i32, i32) {
    %c0_i32 = arith.constant 0 : i32
    %c0_i32_0 = arith.constant 0 : i32
    %c0_i32_1 = arith.constant 0 : i32
    return %c0_i32, %c0_i32_0 : i32, i32
  }
  func.func @transform_2(%arg0: i32) -> (i32, i32) {
    %c0_i32 = arith.constant 0 : i32
    %c0_i32_0 = arith.constant 0 : i32
    %c0_i32_1 = arith.constant 0 : i32
    return %c0_i32, %c0_i32_0 : i32, i32
  }
  func.func @transform_3(%arg0: i32) -> (i32, i32) {
    %c0_i32 = arith.constant 0 : i32
    %c0_i32_0 = arith.constant 0 : i32
    return %arg0, %c0_i32 : i32, i32
  }
}

</mosaic_0001>

<llo_original>
// kernel: tpu_custom_call.1
$region0: #{tpu_custom_call.1}
  #allocation0 [shape = 'u32[]', space=smem, size = 0x4, offset = 0x4, fixed_abs, tag = 'smem constant byte address 0x4 - core index']
  #allocation1 [shape = 'u32[144,128]{1,0:T(1,128)}', space=vmem, size = 0x12000, scoped, tag = 'internal scratch']
  %s0 = inlined_call_operand.hbm [shape: s32[2,8], index: 0, kind: input, shape index: {}]
  %s1 = inlined_call_operand.hbm [shape: bf16[8,128], index: 1, kind: input, shape index: {}]
  %s2 = inlined_call_operand.vmem [shape: f32[1,128], index: 2, kind: input, shape index: {}]
  %s3 = inlined_call_operand.hbm [shape: s8[2,128], index: 3, kind: output, shape index: {}]
  %s4 = sld [smem:[#allocation0]]
  $region30: #{tpu_custom_call.1} parent=0
    _
  %s6 = ssub.s32 1, %s4
  %s7 = scalar_select 0, %s6, %s4
  $region1: #{tpu_custom_call.1} parent=0
    #allocation2 [shape = 'u8[4096]{0}', space=vmem, size = 0x1000, scoped, tag = 'input window, operand 0, single buffered']
    #allocation3 [shape = 's32[1]{0}', space=sflag, size = 0x4, scoped, tag = 'scoped memory for tpu_custom_call.1']
    #allocation4 [shape = 's32[1]{0}', space=sflag, size = 0x4, scoped, tag = 'scoped memory for tpu_custom_call.1']
    #allocation5 [shape = 'u8[2048]{0}', space=vmem, size = 0x800, scoped, tag = 'input window, operand 1, single buffered']
    #allocation6 [shape = 's32[1]{0}', space=sflag, size = 0x4, scoped, tag = 'scoped memory for tpu_custom_call.1']
    #allocation7 [shape = 'u8[1024]{0}', space=vmem, size = 0x400, scoped, tag = 'output window, operand 0, single buffered']
    %8 = vsyncpa [#allocation3], 0
    %9 = vsyncpa [#allocation6], 0
    %10 = vsyncpa [#allocation4], 0
    // Predicated region
    $region2: #{tpu_custom_call.1} parent=1 // pred_check
      _
    $region3: #{tpu_custom_call.1} parent=1 // pred_check_branch
      %12 = sbr.rel (0) target = $region5
    $region4: #{tpu_custom_call.1} parent=1 // pred_region
      %s14 = ssub.s32 128, 32
      %15 = vsyncadd [#allocation3], %s14
      %s16 = sshll.u32 [#allocation2], 4
      %s17 = int_to_ptr.vmem [resolvable:$true] %s16
      %22 = dma.hbm_to_vmem [thread:$0]  %s0, 32, %s17, [#allocation3], 32, 32, 2
    $region5: #{tpu_custom_call.1} parent=1 // pred_fallthru
      _
    // Predicated region
    $region6: #{tpu_custom_call.1} parent=1 // pred_check
      _
    $region7: #{tpu_custom_call.1} parent=1 // pred_check_branch
      %24 = sbr.rel (0) target = $region9
    $region8: #{tpu_custom_call.1} parent=1 // pred_region
      %s26 = ssub.s32 64, 64
      %27 = vsyncadd [#allocation6], %s26
      %s29 = sshll.u32 [#allocation5], 4
      %s30 = int_to_ptr.vmem [resolvable:$true] %s29
      %32 = dma.hbm_to_vmem [thread:$0]  %s1, 64, %s30, [#allocation6]
    $region9: #{tpu_custom_call.1} parent=1 // pred_fallthru
      _
    // Predicated region
    $region10: #{tpu_custom_call.1} parent=1 // pred_check
      _
    $region11: #{tpu_custom_call.1} parent=1 // pred_check_branch
      %34 = sbr.rel (0) target = $region13
    $region12: #{tpu_custom_call.1} parent=1 // pred_region
      _
    $region13: #{tpu_custom_call.1} parent=1 // pred_fallthru
      _
    // Predicated region
    $region14: #{tpu_custom_call.1} parent=1 // pred_check
      _
    $region15: #{tpu_custom_call.1} parent=1 // pred_check_branch
      %36 = sbr.rel (0) target = $region17
    $region16: #{tpu_custom_call.1} parent=1 // pred_region
      %37 = dma.done [#allocation3], 128
    $region17: #{tpu_custom_call.1} parent=1 // pred_fallthru
      _
    // Predicated region
    $region18: #{tpu_custom_call.1} parent=1 // pred_check
      _
    $region19: #{tpu_custom_call.1} parent=1 // pred_check_branch
      %39 = sbr.rel (0) target = $region21
    $region20: #{tpu_custom_call.1} parent=1 // pred_region
      %40 = dma.done [#allocation6], 64
    $region21: #{tpu_custom_call.1} parent=1 // pred_fallthru
      _
    %v44 = vld [vmem:[#allocation5] sm:$0xf]
    %v45 = vld [vmem:[%s2] sm:$0x1]
    %v46 = vld [vmem:[#allocation2] sm:$0xff]
    %v47 = vcvt.s32.f32 %v46
    %v48 = vpack.c.bf16 %v47, %v47
    %vm49 = vcmask 64512
    %v51 = vsel %vm49, %v48, 0
    %vm53 = vcmask 1043456
    %v55 = vsel %vm53, %v44, 0
    %57 = vmatprep.subr.bf16.mxu0 0
    %58 = vmatpush1.bf16.msra.mxu0 %v55
    %59 = vmatprep.subr.bf16.mxu0 0
    %60 = vmatpush1.bf16.msra.mxu0 0
    %61 = vmatprep.subr.bf16.mxu0 0
    %62 = vmatpush1.bf16.msra.mxu0 0
    %63 = vmatprep.subr.bf16.mxu0 0
    %64 = vmatpush1.bf16.msra.mxu0 0
    %65 = vmatprep.subr.bf16.mxu0 0
    %66 = vmatpush1.bf16.msra.mxu0 0
    %67 = vmatprep.subr.bf16.mxu0 0
    %68 = vmatpush1.bf16.msra.mxu0 0
    %69 = vmatprep.subr.bf16.mxu0 0
    %70 = vmatpush1.bf16.msra.mxu0 0
    %71 = vmatprep.subr.bf16.mxu0 0
    %72 = vmatpush1.bf16.msra.mxu0 0
    %73 = vmatprep.subr.bf16.mxu0 0
    %74 = vmatpush1.bf16.msra.mxu0 0
    %75 = vmatprep.subr.bf16.mxu0 0
    %76 = vmatpush1.bf16.msra.mxu0 0
    %77 = vmatprep.subr.bf16.mxu0 0
    %78 = vmatpush1.bf16.msra.mxu0 0
    %79 = vmatprep.subr.bf16.mxu0 0
    %80 = vmatpush1.bf16.msra.mxu0 0
    %81 = vmatprep.subr.bf16.mxu0 0
    %82 = vmatpush1.bf16.msra.mxu0 0
    %83 = vmatprep.subr.bf16.mxu0 0
    %84 = vmatpush1.bf16.msra.mxu0 0
    %85 = vmatprep.subr.bf16.mxu0 0
    %86 = vmatpush1.bf16.msra.mxu0 0
    %87 = vmatprep.subr.bf16.mxu0 0
    %88 = vmatpush1.bf16.msra.mxu0 0
    %89 = vmatprep.mubr.bf16.mxu0 0
    %90 = vmatmul.mubr.bf16.gmra.mrb[0].mxu0 %v51
    %v91 = vpop.f32.mrb[0].mxu0
    %v92 = vadd.f32 0.0, %v91
    %v93 = vpop.f32.mrb[0].mxu0
    %v94 = vpop.f32.mrb[0].mxu0
    %v95 = vpop.f32.mrb[0].mxu0
    %96 = vdwg.mxu0
    %v98 = vlaneseq
    %v99 = vshrl.u32 %v98, 7
    %v100 = vsub.s32 0, %v99
    %v101 = vrot.slane %v45, %v100
    %vm103 = vcmp.eq.f32.partialorder %v92, %v101
    %vm104 = vmpackc.low %vm103, %vm103
    %vm105 = vmpackc.even %vm104, %vm104
    %v106 = vsel %vm105, 16843009, 0
    %v108 = vunpack.c.l.s4 1966171168
    %v109 = vunpack.c.0.s8 %v108
    %v110 = vlaneseq
    %v111 = vshrl.u32 %v110, 7
    %v112 = vsub.s32 %v109, %v111
    %v113 = vrot.slane %v106, %v112
    %v114 = vcombine.high %v113, %v113
    %v116 = vunpack.c.l.s4 1966171168
    %v117 = vunpack.c.0.s8 %v116
    %v118 = vlaneseq
    %v119 = vshrl.u32 %v118, 7
    %v120 = vsub.s32 %v117, %v119
    %v121 = vrot.slane %v113, %v120
    %v123 = vunpack.c.l.s4 1966171168
    %v124 = vunpack.c.0.s8 %v123
    %v125 = vlaneseq
    %v126 = vshrl.u32 %v125, 7
    %v127 = vsub.s32 %v124, %v126
    %v128 = vrot.slane %v114, %v127
    %129 = vst [vmem:[#allocation7] sm:$0x1] %v121
    %130 = vst [vmem:[#allocation7 + $0x1] sm:$0x1] %v128
    // Predicated region
    $region22: #{tpu_custom_call.1} parent=1 // pred_check
      _
    $region23: #{tpu_custom_call.1} parent=1 // pred_check_branch
      %132 = sbr.rel (0) target = $region25
    $region24: #{tpu_custom_call.1} parent=1 // pred_region
      %s134 = ssub.s32 32, 16
      %135 = vsyncadd [#allocation4], %s134
      %s136 = sshll.u32 [#allocation7], 4
      %s137 = int_to_ptr.vmem [resolvable:$true] %s136
      %142 = dma.vmem_to_hbm [thread:$0]  %s137, 16, %s3, [#allocation4], 16, 16, 1
    $region25: #{tpu_custom_call.1} parent=1 // pred_fallthru
      _
    // Predicated region
    $region26: #{tpu_custom_call.1} parent=1 // pred_check
      _
    $region27: #{tpu_custom_call.1} parent=1 // pred_check_branch
      %144 = sbr.rel (0) target = $region29
    $region28: #{tpu_custom_call.1} parent=1 // pred_region
      %145 = dma.done [#allocation4], 32
    $region29: #{tpu_custom_call.1} parent=1 // pred_fallthru
      _
    %146 = vsyncpa [#allocation3], 1
    %147 = vsyncpa [#allocation6], 1
    %148 = vsyncpa [#allocation4], 1

</llo_original>
